<compile_context>
chip_gen: v5e
topology: v5e:2x2
jax: 0.10.0
libtpu: 0.0.40
codegen_flags: <defaults>
</compile_context>

<pallas_src>
import functools

import numpy as np
import jax
import jax.numpy as jnp
from jax.experimental import pallas as pl
from jax.experimental.pallas import tpu as pltpu


def _round_up(x, m):
    return (x + m - 1) // m * m


# ----------------------------------------------------------------------------
# Fused CGC kernel
# ----------------------------------------------------------------------------
def cgc_kernel(x_ref, wa_ref, s_ref, w2_ref, o_ref, *, HA, A_sh, A_t, O):
    f32 = jnp.float32

    # One fused matmul: fc1 pre-activations for all experts, the per-expert
    # constant-1 (bias) lanes and all gate logits.  Biases are folded in via
    # the constant-1 lane appended to x in the wrapper.
    z = jnp.dot(x_ref[...], wa_ref[...], preferred_element_type=f32)  # (TB, HA+A_tot)
    h = jnp.maximum(z[:, :HA], 0.0)                                   # (TB, HA)
    # dropout(0.3): eval-mode identity
    s_all = s_ref[...]                                                # (A_tot, HA)
    w2 = w2_ref[...]                                                  # (HA, O)

    def gate_mix(lo, hi):
        logits = z[:, HA + lo:HA + hi]                                # (TB, A_k)
        m = jnp.max(logits, axis=1, keepdims=True)
        p = jnp.exp(logits - m)
        g = p * pl.reciprocal(jnp.sum(p, axis=1, keepdims=True), approx=False)
        # dropout(0.5): eval-mode identity
        # Expand gate probs over each of its experts' hidden lanes (+ that
        # expert's constant-1 bias lane); experts outside this gate get zeros.
        ge = jnp.dot(g, s_all[lo:hi, :], preferred_element_type=f32)  # (TB, HA)
        # Fused fc2 + per-expert bias + gate-weighted reduction over experts:
        #   sum_a g[b,a] * (h_a @ W2_a + b2_a)
        return jnp.dot(h * ge, w2, preferred_element_type=f32)        # (TB, O)

    # Output slab layout: [shared | task1 | task2]
    o_ref[:, 0:O] = gate_mix(0, A_sh).astype(o_ref.dtype)
    o_ref[:, O:2 * O] = gate_mix(A_sh, A_sh + A_t).astype(o_ref.dtype)
    o_ref[:, 2 * O:3 * O] = gate_mix(A_sh + A_t, A_sh + 2 * A_t).astype(o_ref.dtype)


def cgc_forward(inputs_shared, inputs_task1, inputs_task2, packed,
                if_last=False, block_b=256):
    dims = packed["dims"]
    O, HA_p, Din_p = dims["O"], dims["HA_p"], dims["Din_p"]
    A_sh, A_t = dims["A_sh"], dims["A_t"]
    B, D = inputs_shared.shape

    # Single augmented input slab: [xs | x1 | x2 | 1 | 0-pad]  (B, Din_p)
    cols = [inputs_shared.astype(jnp.float32),
            inputs_task1.astype(jnp.float32),
            inputs_task2.astype(jnp.float32),
            jnp.ones((B, 1), jnp.float32)]
    pad_cols = Din_p - (3 * D + 1)
    if pad_cols:
        cols.append(jnp.zeros((B, pad_cols), jnp.float32))
    x_aug = jnp.concatenate(cols, axis=1)

    # Batch tiling (parallel grid -> both TCs on v7x at production batch).
    TB = min(block_b, _round_up(B, 8))
    Bp = _round_up(B, TB)
    if Bp != B:
        x_aug = jnp.pad(x_aug, ((0, Bp - B), (0, 0)))

    kernel = functools.partial(cgc_kernel, HA=HA_p, A_sh=A_sh, A_t=A_t, O=O)
    slab = pl.pallas_call(
        kernel,
        out_shape=jax.ShapeDtypeStruct((Bp, 3 * O), jnp.float32),
        grid=(Bp // TB,),
        in_specs=[
            pl.BlockSpec((TB, Din_p), lambda i: (i, 0)),
            pl.BlockSpec(packed["w_a"].shape, lambda i: (0, 0)),
            pl.BlockSpec(packed["s"].shape, lambda i: (0, 0)),
            pl.BlockSpec(packed["w2"].shape, lambda i: (0, 0)),
        ],
        out_specs=pl.BlockSpec((TB, 3 * O), lambda i: (i, 0)),
        compiler_params=pltpu.CompilerParams(
            dimension_semantics=("parallel",)),
    )(x_aug, packed["w_a"], packed["s"], packed["w2"])

    out_sh = slab[:B, 0:O]
    out_t1 = slab[:B, O:2 * O]
    out_t2 = slab[:B, 2 * O:3 * O]
    if if_last:
        return [out_t1, out_t2]
    return [out_sh, out_t1, out_t2]


# ----------------------------------------------------------------------------
# Parameter construction (deterministic, PyTorch-Linear-style uniform init)
# ----------------------------------------------------------------------------
def init_linear(key, fan_in, fan_out):
    k1, k2 = jax.random.split(key)
    bound = 1.0 / np.sqrt(fan_in)
    w = jax.random.uniform(k1, (fan_in, fan_out), jnp.float32, -bound, bound)
    b = jax.random.uniform(k2, (1, fan_out), jnp.float32, -bound, bound)
    return w, b


def init_expert_group(key, n_experts, D, H, O):
    w1s, b1s, w2s, b2s = [], [], [], []
    for _ in range(n_experts):
        key, k1, k2 = jax.random.split(key, 3)
        w1, b1 = init_linear(k1, D, H)
        w2, b2 = init_linear(k2, H, O)
        w1s.append(w1); b1s.append(b1)
        w2s.append(w2); b2s.append(b2)
    return (jnp.stack(w1s), jnp.stack(b1s), jnp.stack(w2s), jnp.stack(b2s))


def pack_cgc_params(params):
    """Pack ALL CGC parameters into three lane-dense slabs (one-time, host side)."""
    w1_sh, b1_sh, w2_sh, b2_sh = [np.asarray(a, np.float32) for a in params["experts_shared"]]
    w1_t1, b1_t1, w2_t1, b2_t1 = [np.asarray(a, np.float32) for a in params["experts_task1"]]
    w1_t2, b1_t2, w2_t2, b2_t2 = [np.asarray(a, np.float32) for a in params["experts_task2"]]
    wg_sh, bg_sh = [np.asarray(a, np.float32) for a in params["gate_shared"]]
    wg_t1, bg_t1 = [np.asarray(a, np.float32) for a in params["gate_task1"]]
    wg_t2, bg_t2 = [np.asarray(a, np.float32) for a in params["gate_task2"]]

    E_spec, D, H = w1_t1.shape
    E_sh = w1_sh.shape[0]
    O = w2_sh.shape[2]
    E = 2 * E_spec + E_sh
    A_sh = bg_sh.shape[1]
    A_t = bg_t1.shape[1]
    A_tot = A_sh + 2 * A_t

    HA = E * H + E                   # expert hidden lanes + one ones-lane per expert
    HA_p = _round_up(HA, 8)          # sublane-pad the fused fc2 contraction dim
    Din = 3 * D + 1                  # [xs | x1 | x2 | 1]
    Din_p = _round_up(Din, 8)
    bias_row = 3 * D

    # Global expert order: [task1 experts, task2 experts, shared experts]
    w1_all = np.concatenate([w1_t1, w1_t2, w1_sh], axis=0)   # (E, D, H)
    b1_all = np.concatenate([b1_t1, b1_t2, b1_sh], axis=0)   # (E, 1, H)
    w2_all = np.concatenate([w2_t1, w2_t2, w2_sh], axis=0)   # (E, H, O)
    b2_all = np.concatenate([b2_t1, b2_t2, b2_sh], axis=0)   # (E, 1, O)
    x_seg = [1] * E_spec + [2] * E_spec + [0] * E_sh         # which third of x feeds expert e

    # --- W_a: one slab -> [expert hiddens | per-expert ones | pad | gate logits] ---
    W_a = np.zeros((Din_p, HA_p + A_tot), np.float32)
    for e in range(E):
        r0 = x_seg[e] * D
        W_a[r0:r0 + D, e * H:(e + 1) * H] = w1_all[e]
        W_a[bias_row, e * H:(e + 1) * H] = b1_all[e, 0]
        W_a[bias_row, E * H + e] = 1.0                 # relu(1) -> constant-1 lane
    c = HA_p
    W_a[0:D, c:c + A_sh] = wg_sh
    W_a[bias_row, c:c + A_sh] = bg_sh[0]
    c += A_sh
    W_a[D:2 * D, c:c + A_t] = wg_t1
    W_a[bias_row, c:c + A_t] = bg_t1[0]
    c += A_t
    W_a[2 * D:3 * D, c:c + A_t] = wg_t2
    W_a[bias_row, c:c + A_t] = bg_t2[0]

    # --- S: gate prob -> per-expert-lane expansion, rows = [shared | task1 | task2] ---
    gate_experts = [
        list(range(E)),                                              # shared: t1,t2,sh
        list(range(0, E_spec)) + list(range(2 * E_spec, E)),         # task1: t1 + shared
        list(range(E_spec, 2 * E_spec)) + list(range(2 * E_spec, E)),  # task2: t2 + shared
    ]
    S = np.zeros((A_tot, HA_p), np.float32)
    r = 0
    for experts in gate_experts:
        for a, e in enumerate(experts):
            S[r + a, e * H:(e + 1) * H] = 1.0
            S[r + a, E * H + e] = 1.0
        r += len(experts)

    # --- W2_aug: vstacked fc2 weights, with each expert's b2 on its ones-lane row ---
    W2 = np.zeros((HA_p, O), np.float32)
    for e in range(E):
        W2[e * H:(e + 1) * H, :] = w2_all[e]
        W2[E * H + e, :] = b2_all[e, 0]

    dims = dict(D=D, H=H, O=O, E=E, HA_p=HA_p, Din_p=Din_p,
                A_sh=A_sh, A_t=A_t, A_tot=A_tot)
    return dict(w_a=jnp.asarray(W_a), s=jnp.asarray(S), w2=jnp.asarray(W2),
                dims=dims)


# ----------------------------------------------------------------------------
# Pure-JAX reference (mirrors the PyTorch forward, eval mode)
# ----------------------------------------------------------------------------
def _experts_ref(x, w1, b1, w2, b2):
    h = jnp.maximum(
        jnp.einsum("bd,edh->ebh", x, w1, precision=jax.lax.Precision.HIGHEST) + b1,
        0.0)
    return jnp.einsum("ebh,eho->ebo", h, w2,
                      precision=jax.lax.Precision.HIGHEST) + b2


def _gate_ref(xg, wg, bg, ex):
    logits = jnp.dot(xg, wg, precision=jax.lax.Precision.HIGHEST) + bg
    g = jax.nn.softmax(logits, axis=1)
    return jnp.einsum("abc,ba->bc", ex, g, precision=jax.lax.Precision.HIGHEST)


def cgc_ref(xs, x1, x2, params, if_last=False):
    e_sh = _experts_ref(xs, *params["experts_shared"])
    e_t1 = _experts_ref(x1, *params["experts_task1"])
    e_t2 = _experts_ref(x2, *params["experts_task2"])
    out_t1 = _gate_ref(x1, *params["gate_task1"], jnp.concatenate([e_t1, e_sh], 0))
    out_t2 = _gate_ref(x2, *params["gate_task2"], jnp.concatenate([e_t2, e_sh], 0))
    out_sh = _gate_ref(xs, *params["gate_shared"],
                       jnp.concatenate([e_t1, e_t2, e_sh], 0))
    if if_last:
        return [out_t1, out_t2]
    return [out_sh, out_t1, out_t2]


# ----------------------------------------------------------------------------
if __name__ == "__main__":
    B = 8
    input_size = 32
    experts_hidden = 16
    experts_out = 16
    num_specific = 2
    num_shared = 2
    if_last = False

    key = jax.random.PRNGKey(0)
    ks = jax.random.split(key, 10)

    params = {
        "experts_shared": init_expert_group(ks[0], num_shared, input_size,
                                            experts_hidden, experts_out),
        "experts_task1": init_expert_group(ks[1], num_specific, input_size,
                                           experts_hidden, experts_out),
        "experts_task2": init_expert_group(ks[2], num_specific, input_size,
                                           experts_hidden, experts_out),
        "gate_shared": init_linear(ks[3], input_size,
                                   num_specific * 2 + num_shared),
        "gate_task1": init_linear(ks[4], input_size, num_specific + num_shared),
        "gate_task2": init_linear(ks[5], input_size, num_specific + num_shared),
    }
    packed = pack_cgc_params(params)

    inputs_shared = jax.random.normal(ks[6], (B, input_size), jnp.float32)
    inputs_task1 = jax.random.normal(ks[7], (B, input_size), jnp.float32)
    inputs_task2 = jax.random.normal(ks[8], (B, input_size), jnp.float32)

    outs = cgc_forward(inputs_shared, inputs_task1, inputs_task2, packed,
                       if_last=if_last)
    outs = jax.block_until_ready(outs)

    refs = cgc_ref(inputs_shared, inputs_task1, inputs_task2, params,
                   if_last=if_last)
    for o, r in zip(outs, refs):
        np.testing.assert_allclose(np.asarray(o), np.asarray(r),
                                   rtol=1e-4, atol=1e-4)

    print("KERNEL_OK")
</pallas_src>

<mosaic_0001>
module attributes {stable_mosaic.version = 11 : i64} {
  func.func @cgc_kernel(%arg0: i32, %arg1: memref<8x104xf32, #tpu.memory_space<vmem>>, %arg2: memref<104x118xf32, #tpu.memory_space<vmem>>, %arg3: memref<14x104xf32, #tpu.memory_space<vmem>>, %arg4: memref<104x16xf32, #tpu.memory_space<vmem>>, %arg5: memref<8x48xf32, #tpu.memory_space<vmem>>) attributes {dimension_semantics = [#tpu.dimension_semantics<parallel>], iteration_bounds = array<i64: 1>, scalar_prefetch = 0 : i64, scratch_operands = 0 : i64, tpu.core_type = #tpu.core_type<tc>, window_params = [{transform_indices = @transform_0, window_bounds = array<i64: 8, 104>}, {pipeline_mode = #tpu.pipeline_mode<synchronous>, transform_indices = @transform_1, window_bounds = array<i64: 104, 118>}, {pipeline_mode = #tpu.pipeline_mode<synchronous>, transform_indices = @transform_2, window_bounds = array<i64: 14, 104>}, {pipeline_mode = #tpu.pipeline_mode<synchronous>, transform_indices = @transform_3, window_bounds = array<i64: 104, 16>}, {transform_indices = @transform_4, window_bounds = array<i64: 8, 48>}]} {
    %c0 = arith.constant 0 : index
    %c0_0 = arith.constant 0 : index
    %0 = vector.load %arg1[%c0, %c0_0] : memref<8x104xf32, #tpu.memory_space<vmem>>, vector<8x104xf32>
    %c0_1 = arith.constant 0 : index
    %c0_2 = arith.constant 0 : index
    %1 = vector.load %arg2[%c0_1, %c0_2] : memref<104x118xf32, #tpu.memory_space<vmem>>, vector<104x118xf32>
    %cst = arith.constant dense<0.000000e+00> : vector<8x118xf32>
    %2 = tpu.matmul %0, %1, %cst {dimension_numbers = #tpu.dot_dimension_numbers<[1], [0], [0], [1], [0, 0, 1, 1], [], []>} : vector<8x104xf32>, vector<104x118xf32>, vector<8x118xf32> -> vector<8x118xf32>
    %3 = vector.extract_strided_slice %2 {offsets = [0, 0], sizes = [8, 104], strides = [1, 1]} : vector<8x118xf32> to vector<8x104xf32>
    %cst_3 = arith.constant 0.000000e+00 : f32
    %4 = vector.broadcast %cst_3 : f32 to vector<8x104xf32>
    %5 = arith.maximumf %3, %4 : vector<8x104xf32>
    %c0_4 = arith.constant 0 : index
    %c0_5 = arith.constant 0 : index
    %6 = vector.load %arg3[%c0_4, %c0_5] : memref<14x104xf32, #tpu.memory_space<vmem>>, vector<14x104xf32>
    %c0_6 = arith.constant 0 : index
    %c0_7 = arith.constant 0 : index
    %7 = vector.load %arg4[%c0_6, %c0_7] : memref<104x16xf32, #tpu.memory_space<vmem>>, vector<104x16xf32>
    %8 = vector.extract_strided_slice %2 {offsets = [0, 104], sizes = [8, 6], strides = [1, 1]} : vector<8x118xf32> to vector<8x6xf32>
    %cst_8 = arith.constant dense<0xFF800000> : vector<8xf32>
    %9 = vector.multi_reduction <maximumf>, %8, %cst_8 [1] : vector<8x6xf32> to vector<8xf32>
    %10 = vector.shape_cast %9 : vector<8xf32> to vector<8x1xf32>
    %11 = vector.broadcast %10 : vector<8x1xf32> to vector<8x6xf32>
    %12 = arith.subf %8, %11 : vector<8x6xf32>
    %13 = math.exp %12 : vector<8x6xf32>
    %cst_9 = arith.constant dense<0.000000e+00> : vector<8xf32>
    %14 = vector.multi_reduction <add>, %13, %cst_9 [1] : vector<8x6xf32> to vector<8xf32>
    %15 = vector.shape_cast %14 : vector<8xf32> to vector<8x1xf32>
    %16 = tpu.reciprocal %15 : vector<8x1xf32> -> vector<8x1xf32>
    %17 = vector.broadcast %16 : vector<8x1xf32> to vector<8x6xf32>
    %18 = arith.mulf %13, %17 : vector<8x6xf32>
    %19 = vector.extract_strided_slice %6 {offsets = [0, 0], sizes = [6, 104], strides = [1, 1]} : vector<14x104xf32> to vector<6x104xf32>
    %cst_10 = arith.constant dense<0.000000e+00> : vector<8x104xf32>
    %20 = tpu.matmul %18, %19, %cst_10 {dimension_numbers = #tpu.dot_dimension_numbers<[1], [0], [0], [1], [0, 0, 1, 1], [], []>} : vector<8x6xf32>, vector<6x104xf32>, vector<8x104xf32> -> vector<8x104xf32>
    %21 = arith.mulf %5, %20 : vector<8x104xf32>
    %cst_11 = arith.constant dense<0.000000e+00> : vector<8x16xf32>
    %22 = tpu.matmul %21, %7, %cst_11 {dimension_numbers = #tpu.dot_dimension_numbers<[1], [0], [0], [1], [0, 0, 1, 1], [], []>} : vector<8x104xf32>, vector<104x16xf32>, vector<8x16xf32> -> vector<8x16xf32>
    %c0_12 = arith.constant 0 : index
    %c0_13 = arith.constant 0 : index
    %23 = vector.load %arg5[%c0_12, %c0_13] : memref<8x48xf32, #tpu.memory_space<vmem>>, vector<8x16xf32>
    tpu.vector_store %arg5[%c0_12, %c0_13], %22 {strides = array<i32>} : memref<8x48xf32, #tpu.memory_space<vmem>>, vector<8x16xf32>,
    %24 = vector.extract_strided_slice %2 {offsets = [0, 110], sizes = [8, 4], strides = [1, 1]} : vector<8x118xf32> to vector<8x4xf32>
    %cst_14 = arith.constant dense<0xFF800000> : vector<8xf32>
    %25 = vector.multi_reduction <maximumf>, %24, %cst_14 [1] : vector<8x4xf32> to vector<8xf32>
    %26 = vector.shape_cast %25 : vector<8xf32> to vector<8x1xf32>
    %27 = vector.broadcast %26 : vector<8x1xf32> to vector<8x4xf32>
    %28 = arith.subf %24, %27 : vector<8x4xf32>
    %29 = math.exp %28 : vector<8x4xf32>
    %cst_15 = arith.constant dense<0.000000e+00> : vector<8xf32>
    %30 = vector.multi_reduction <add>, %29, %cst_15 [1] : vector<8x4xf32> to vector<8xf32>
    %31 = vector.shape_cast %30 : vector<8xf32> to vector<8x1xf32>
    %32 = tpu.reciprocal %31 : vector<8x1xf32> -> vector<8x1xf32>
    %33 = vector.broadcast %32 : vector<8x1xf32> to vector<8x4xf32>
    %34 = arith.mulf %29, %33 : vector<8x4xf32>
    %35 = vector.extract_strided_slice %6 {offsets = [6, 0], sizes = [4, 104], strides = [1, 1]} : vector<14x104xf32> to vector<4x104xf32>
    %cst_16 = arith.constant dense<0.000000e+00> : vector<8x104xf32>
    %36 = tpu.matmul %34, %35, %cst_16 {dimension_numbers = #tpu.dot_dimension_numbers<[1], [0], [0], [1], [0, 0, 1, 1], [], []>} : vector<8x4xf32>, vector<4x104xf32>, vector<8x104xf32> -> vector<8x104xf32>
    %37 = arith.mulf %5, %36 : vector<8x104xf32>
    %cst_17 = arith.constant dense<0.000000e+00> : vector<8x16xf32>
    %38 = tpu.matmul %37, %7, %cst_17 {dimension_numbers = #tpu.dot_dimension_numbers<[1], [0], [0], [1], [0, 0, 1, 1], [], []>} : vector<8x104xf32>, vector<104x16xf32>, vector<8x16xf32> -> vector<8x16xf32>
    %c0_18 = arith.constant 0 : index
    %c16 = arith.constant 16 : index
    %39 = vector.load %arg5[%c0_18, %c16] : memref<8x48xf32, #tpu.memory_space<vmem>>, vector<8x16xf32>
    tpu.vector_store %arg5[%c0_18, %c16], %38 {strides = array<i32>} : memref<8x48xf32, #tpu.memory_space<vmem>>, vector<8x16xf32>,
    %40 = vector.extract_strided_slice %2 {offsets = [0, 114], sizes = [8, 4], strides = [1, 1]} : vector<8x118xf32> to vector<8x4xf32>
    %cst_19 = arith.constant dense<0xFF800000> : vector<8xf32>
    %41 = vector.multi_reduction <maximumf>, %40, %cst_19 [1] : vector<8x4xf32> to vector<8xf32>
    %42 = vector.shape_cast %41 : vector<8xf32> to vector<8x1xf32>
    %43 = vector.broadcast %42 : vector<8x1xf32> to vector<8x4xf32>
    %44 = arith.subf %40, %43 : vector<8x4xf32>
    %45 = math.exp %44 : vector<8x4xf32>
    %cst_20 = arith.constant dense<0.000000e+00> : vector<8xf32>
    %46 = vector.multi_reduction <add>, %45, %cst_20 [1] : vector<8x4xf32> to vector<8xf32>
    %47 = vector.shape_cast %46 : vector<8xf32> to vector<8x1xf32>
    %48 = tpu.reciprocal %47 : vector<8x1xf32> -> vector<8x1xf32>
    %49 = vector.broadcast %48 : vector<8x1xf32> to vector<8x4xf32>
    %50 = arith.mulf %45, %49 : vector<8x4xf32>
    %51 = vector.extract_strided_slice %6 {offsets = [10, 0], sizes = [4, 104], strides = [1, 1]} : vector<14x104xf32> to vector<4x104xf32>
    %cst_21 = arith.constant dense<0.000000e+00> : vector<8x104xf32>
    %52 = tpu.matmul %50, %51, %cst_21 {dimension_numbers = #tpu.dot_dimension_numbers<[1], [0], [0], [1], [0, 0, 1, 1], [], []>} : vector<8x4xf32>, vector<4x104xf32>, vector<8x104xf32> -> vector<8x104xf32>
    %53 = arith.mulf %5, %52 : vector<8x104xf32>
    %cst_22 = arith.constant dense<0.000000e+00> : vector<8x16xf32>
    %54 = tpu.matmul %53, %7, %cst_22 {dimension_numbers = #tpu.dot_dimension_numbers<[1], [0], [0], [1], [0, 0, 1, 1], [], []>} : vector<8x104xf32>, vector<104x16xf32>, vector<8x16xf32> -> vector<8x16xf32>
    %c0_23 = arith.constant 0 : index
    %c32 = arith.constant 32 : index
    %55 = vector.load %arg5[%c0_23, %c32] : memref<8x48xf32, #tpu.memory_space<vmem>>, vector<8x16xf32>
    tpu.vector_store %arg5[%c0_23, %c32], %54 {strides = array<i32>} : memref<8x48xf32, #tpu.memory_space<vmem>>, vector<8x16xf32>,
    return
  }
  func.func @transform_0(%arg0: i32) -> (i32, i32) {
    %c0_i32 = arith.constant 0 : i32
    %c0_i32_0 = arith.constant 0 : i32
    return %arg0, %c0_i32 : i32, i32
  }
  func.func @transform_1(%arg0: i32) -> (i32, i32) {
    %c0_i32 = arith.constant 0 : i32
    %c0_i32_0 = arith.constant 0 : i32
    %c0_i32_1 = arith.constant 0 : i32
    return %c0_i32, %c0_i32_0 : i32, i32
  }
  func.func @transform_2(%arg0: i32) -> (i32, i32) {
    %c0_i32 = arith.constant 0 : i32
    %c0_i32_0 = arith.constant 0 : i32
    %c0_i32_1 = arith.constant 0 : i32
    return %c0_i32, %c0_i32_0 : i32, i32
  }
  func.func @transform_3(%arg0: i32) -> (i32, i32) {
    %c0_i32 = arith.constant 0 : i32
    %c0_i32_0 = arith.constant 0 : i32
    %c0_i32_1 = arith.constant 0 : i32
    return %c0_i32, %c0_i32_0 : i32, i32
  }
  func.func @transform_4(%arg0: i32) -> (i32, i32) {
    %c0_i32 = arith.constant 0 : i32
    %c0_i32_0 = arith.constant 0 : i32
    return %arg0, %c0_i32 : i32, i32
  }
}

</mosaic_0001>

<llo_original>
// kernel: tpu_custom_call.1
$region0: #{tpu_custom_call.1}
  #allocation0 [shape = 'u32[]', space=smem, size = 0x4, offset = 0x4, fixed_abs, tag = 'smem constant byte address 0x4 - core index']
  #allocation1 [shape = 'u32[72,128]{1,0:T(1,128)}', space=vmem, size = 0x9000, scoped, tag = 'internal scratch']
  %s0 = inlined_call_operand.hbm [shape: f32[8,104], index: 0, kind: input, shape index: {}]
  %s1 = inlined_call_operand.vmem [shape: f32[104,118], index: 1, kind: input, shape index: {}]
  %s2 = inlined_call_operand.vmem [shape: f32[14,104], index: 2, kind: input, shape index: {}]
  %s3 = inlined_call_operand.vmem [shape: f32[104,16], index: 3, kind: input, shape index: {}]
  %s4 = inlined_call_operand.hbm [shape: f32[8,48], index: 4, kind: output, shape index: {}]
  %s5 = sld [smem:[#allocation0]]
  $region30: #{tpu_custom_call.1} parent=0
    _
  %s7 = ssub.s32 1, %s5
  %s8 = scalar_select 0, %s7, %s5
  $region1: #{tpu_custom_call.1} parent=0
    #allocation2 [shape = 'u8[4096]{0}', space=vmem, size = 0x1000, scoped, tag = 'input window, operand 0, single buffered']
    #allocation3 [shape = 's32[1]{0}', space=sflag, size = 0x4, scoped, tag = 'scoped memory for tpu_custom_call.1']
    #allocation4 [shape = 's32[1]{0}', space=sflag, size = 0x4, scoped, tag = 'scoped memory for tpu_custom_call.1']
    #allocation5 [shape = 'u8[4096]{0}', space=vmem, size = 0x1000, scoped, tag = 'output window, operand 0, single buffered']
    %9 = vsyncpa [#allocation3], 0
    %10 = vsyncpa [#allocation4], 0
    // Predicated region
    $region2: #{tpu_custom_call.1} parent=1 // pred_check
      _
    $region3: #{tpu_custom_call.1} parent=1 // pred_check_branch
      %12 = sbr.rel (0) target = $region5
    $region4: #{tpu_custom_call.1} parent=1 // pred_region
      %14 = vsyncadd [#allocation3], 0
      %s16 = sshll.u32 %s0, 4
      %s17 = int_to_ptr.hbm [resolvable:$true] %s16
      %s18 = sshll.u32 [#allocation2], 4
      %s19 = int_to_ptr.vmem [resolvable:$true] %s18
      %21 = dma.hbm_to_vmem [thread:$0]  %s17, 128, %s19, [#allocation3]
    $region5: #{tpu_custom_call.1} parent=1 // pred_fallthru
      _
    // Predicated region
    $region6: #{tpu_custom_call.1} parent=1 // pred_check
      _
    $region7: #{tpu_custom_call.1} parent=1 // pred_check_branch
      %23 = sbr.rel (0) target = $region9
    $region8: #{tpu_custom_call.1} parent=1 // pred_region
      _
    $region9: #{tpu_custom_call.1} parent=1 // pred_fallthru
      _
    // Predicated region
    $region10: #{tpu_custom_call.1} parent=1 // pred_check
      _
    $region11: #{tpu_custom_call.1} parent=1 // pred_check_branch
      %25 = sbr.rel (0) target = $region13
    $region12: #{tpu_custom_call.1} parent=1 // pred_region
      _
    $region13: #{tpu_custom_call.1} parent=1 // pred_fallthru
      _
    // Predicated region
    $region14: #{tpu_custom_call.1} parent=1 // pred_check
      _
    $region15: #{tpu_custom_call.1} parent=1 // pred_check_branch
      %27 = sbr.rel (0) target = $region17
    $region16: #{tpu_custom_call.1} parent=1 // pred_region
      _
    $region17: #{tpu_custom_call.1} parent=1 // pred_fallthru
      _
    // Predicated region
    $region18: #{tpu_custom_call.1} parent=1 // pred_check
      _
    $region19: #{tpu_custom_call.1} parent=1 // pred_check_branch
      %29 = sbr.rel (0) target = $region21
    $region20: #{tpu_custom_call.1} parent=1 // pred_region
      %31 = dma.done [#allocation3], 128
    $region21: #{tpu_custom_call.1} parent=1 // pred_fallthru
      _
    %v32 = vld [vmem:[#allocation2] sm:$0xff]
    %v33 = vld [vmem:[%s1] sm:$0xff]
    %v34 = vld [vmem:[%s1 + $0x8] sm:$0xff]
    %v35 = vld [vmem:[%s1 + $0x10] sm:$0xff]
    %v36 = vld [vmem:[%s1 + $0x18] sm:$0xff]
    %v37 = vld [vmem:[%s1 + $0x20] sm:$0xff]
    %v38 = vld [vmem:[%s1 + $0x28] sm:$0xff]
    %v39 = vld [vmem:[%s1 + $0x30] sm:$0xff]
    %v40 = vld [vmem:[%s1 + $0x38] sm:$0xff]
    %v41 = vld [vmem:[%s1 + $0x40] sm:$0xff]
    %v42 = vld [vmem:[%s1 + $0x48] sm:$0xff]
    %v43 = vld [vmem:[%s1 + $0x50] sm:$0xff]
    %v44 = vld [vmem:[%s1 + $0x58] sm:$0xff]
    %v45 = vld [vmem:[%s1 + $0x60] sm:$0xff]
    %vm46 = vcmask 850944
    %v48 = vsel %vm46, %v32, 0
    %50 = vmatpush.msra.mxu0 0.0
    %51 = vmatpush.msra.mxu0 0.0
    %52 = vmatpush.msra.mxu0 0.0
    %53 = vmatpush.msra.mxu0 %v45
    %54 = vmatpush.msra.mxu0 %v44
    %55 = vmatpush.msra.mxu0 %v43
    %56 = vmatpush.msra.mxu0 %v42
    %57 = vmatpush.msra.mxu0 %v41
    %58 = vmatpush.msra.mxu0 %v40
    %59 = vmatpush.msra.mxu0 %v39
    %60 = vmatpush.msra.mxu0 %v38
    %61 = vmatpush.msra.mxu0 %v37
    %62 = vmatpush.msra.mxu0 %v36
    %63 = vmatpush.msra.mxu0 %v35
    %64 = vmatpush.msra.mxu0 %v34
    %65 = vmatpush.msra.mxu0 %v33
    %66 = vmatmul.f32.gmra.mxu0 %v48
    %v67 = vpop.f32.mrf.mxu0
    %v68 = vadd.f32 0.0, %v67
    %69 = vdwg.mxu0
    %v70 = vmax.f32 %v68, 0.0
    %v71 = vld [vmem:[%s2] sm:$0xff]
    %v72 = vld [vmem:[%s2 + $0x8] sm:$0x3f]
    %v73 = vld [vmem:[%s3] sm:$0xff]
    %v74 = vld [vmem:[%s3 + $0x8] sm:$0xff]
    %v75 = vld [vmem:[%s3 + $0x10] sm:$0xff]
    %v76 = vld [vmem:[%s3 + $0x18] sm:$0xff]
    %v77 = vld [vmem:[%s3 + $0x20] sm:$0xff]
    %v78 = vld [vmem:[%s3 + $0x28] sm:$0xff]
    %v79 = vld [vmem:[%s3 + $0x30] sm:$0xff]
    %v80 = vld [vmem:[%s3 + $0x38] sm:$0xff]
    %v81 = vld [vmem:[%s3 + $0x40] sm:$0xff]
    %v82 = vld [vmem:[%s3 + $0x48] sm:$0xff]
    %v83 = vld [vmem:[%s3 + $0x50] sm:$0xff]
    %v84 = vld [vmem:[%s3 + $0x58] sm:$0xff]
    %v85 = vld [vmem:[%s3 + $0x60] sm:$0xff]
    %vm86 = vcmask 900928
    %v87 = vsel %vm86, %v68, -inf
    %88 = vmax.xlane.f32.xlu0 %v87
    %v89 = vpop.xlane.xlu0 %88
    %v90 = vsub.f32 %v68, %v89
    %v91 = vmul.f32 %v90, 1.442695
    %v92 = vpow.pop %v91
    %94 = vrot.lane.b32.xlu0 %v92, 24
    %v95 = vpop.permute.xlu0 %94
    %vm97 = vcmask 48128
    %v98 = vsel %vm97, %v95, 0.0
    %99 = vadd.xlane.f32.xlu0 %v98
    %v100 = vpop.xlane.xlu0 %99
    %v101 = vrcp.pop %v100
    %v102 = vmul.f32 %v100, %v101
    %v103 = vsub.f32 1.0, %v102
    %v104 = vmul.f32 %v101, %v103
    %v105 = vadd.f32 %v101, %v104
    %vm106 = vweird.f32 %v100
    %vm107 = vweird.f32 %v101
    %vm108 = vmor %vm106, %vm107
    %v109 = vsel %vm108, %v101, %v105
    %v110 = vand.u32 2147483647, %v100
    %vm111 = vcmp.eq.f32.partialorder %v110, 8.507059e+37
    %v112 = vand.u32 %v100, 2147483648
    %v113 = vor.u32 1.1754944e-38, %v112
    %v114 = vsel %vm111, %v113, %v109
    %v115 = vmul.f32 %v92, %v114
    %117 = vrot.lane.b32.xlu0 %v115, 24
    %v118 = vpop.permute.xlu0 %117
    %v119 = vsel %vm97, %v118, 0
    %vm121 = vcmask 1045504
    %v123 = vsel %vm121, %v71, 0
    %125 = vmatpush.msra.mxu0 0.0
    %126 = vmatpush.msra.mxu0 0.0
    %127 = vmatpush.msra.mxu0 0.0
    %128 = vmatpush.msra.mxu0 0.0
    %129 = vmatpush.msra.mxu0 0.0
    %130 = vmatpush.msra.mxu0 0.0
    %131 = vmatpush.msra.mxu0 0.0
    %132 = vmatpush.msra.mxu0 0.0
    %133 = vmatpush.msra.mxu0 0.0
    %134 = vmatpush.msra.mxu0 0.0
    %135 = vmatpush.msra.mxu0 0.0
    %136 = vmatpush.msra.mxu0 0.0
    %137 = vmatpush.msra.mxu0 0.0
    %138 = vmatpush.msra.mxu0 0.0
    %139 = vmatpush.msra.mxu0 0.0
    %140 = vmatpush.msra.mxu0 %v123
    %141 = vmatmul.f32.gmra.mxu0 %v119
    %v142 = vpop.f32.mrf.mxu0
    %v143 = vadd.f32 0.0, %v142
    %144 = vdwg.mxu0
    %v145 = vmul.f32 %v70, %v143
    %v147 = vsel %vm46, %v145, 0
    %149 = vmatpush.msra.mxu0 0.0
    %150 = vmatpush.msra.mxu0 0.0
    %151 = vmatpush.msra.mxu0 0.0
    %152 = vmatpush.msra.mxu0 %v85
    %153 = vmatpush.msra.mxu0 %v84
    %154 = vmatpush.msra.mxu0 %v83
    %155 = vmatpush.msra.mxu0 %v82
    %156 = vmatpush.msra.mxu0 %v81
    %157 = vmatpush.msra.mxu0 %v80
    %158 = vmatpush.msra.mxu0 %v79
    %159 = vmatpush.msra.mxu0 %v78
    %160 = vmatpush.msra.mxu0 %v77
    %161 = vmatpush.msra.mxu0 %v76
    %162 = vmatpush.msra.mxu0 %v75
    %163 = vmatpush.msra.mxu0 %v74
    %164 = vmatpush.msra.mxu0 %v73
    %165 = vmatmul.f32.gmra.mxu0 %v147
    %v166 = vpop.f32.mrf.mxu0
    %v167 = vadd.f32 0.0, %v166
    %168 = vdwg.mxu0
    %vm169 = vcmask 130048
    %170 = vst.msk [vmem:[#allocation5] sm:$0xff] %vm169, %v167
    %vm171 = vcmask 933744
    %v172 = vsel %vm171, %v68, -inf
    %173 = vmax.xlane.f32.xlu0 %v172
    %v174 = vpop.xlane.xlu0 %173
    %v175 = vsub.f32 %v68, %v174
    %v176 = vmul.f32 %v175, 1.442695
    %v177 = vpow.pop %v176
    %179 = vrot.lane.b32.xlu0 %v177, 18
    %v180 = vpop.permute.xlu0 %179
    %vm182 = vcmask 31744
    %v183 = vsel %vm182, %v180, 0.0
    %184 = vadd.xlane.f32.xlu0 %v183
    %v185 = vpop.xlane.xlu0 %184
    %v186 = vrcp.pop %v185
    %v187 = vmul.f32 %v185, %v186
    %v188 = vsub.f32 1.0, %v187
    %v189 = vmul.f32 %v186, %v188
    %v190 = vadd.f32 %v186, %v189
    %vm191 = vweird.f32 %v185
    %vm192 = vweird.f32 %v186
    %vm193 = vmor %vm191, %vm192
    %v194 = vsel %vm193, %v186, %v190
    %v195 = vand.u32 2147483647, %v185
    %vm196 = vcmp.eq.f32.partialorder %v195, 8.507059e+37
    %v197 = vand.u32 %v185, 2147483648
    %v198 = vor.u32 1.1754944e-38, %v197
    %v199 = vsel %vm196, %v198, %v194
    %v200 = vmul.f32 %v177, %v199
    %202 = vrot.lane.b32.xlu0 %v200, 18
    %v203 = vpop.permute.xlu0 %202
    %vm205 = vcmask 1041408
    %v206 = vrot.slane %v71, 6
    %v207 = vrot.slane %v72, 6
    %v208 = vsel %vm205, %v206, %v207
    %v209 = vsel %vm182, %v203, 0
    %vm211 = vcmask 1043456
    %v212 = vsel %vm211, %v208, 0
    %214 = vmatpush.msra.mxu0 0.0
    %215 = vmatpush.msra.mxu0 0.0
    %216 = vmatpush.msra.mxu0 0.0
    %217 = vmatpush.msra.mxu0 0.0
    %218 = vmatpush.msra.mxu0 0.0
    %219 = vmatpush.msra.mxu0 0.0
    %220 = vmatpush.msra.mxu0 0.0
    %221 = vmatpush.msra.mxu0 0.0
    %222 = vmatpush.msra.mxu0 0.0
    %223 = vmatpush.msra.mxu0 0.0
    %224 = vmatpush.msra.mxu0 0.0
    %225 = vmatpush.msra.mxu0 0.0
    %226 = vmatpush.msra.mxu0 0.0
    %227 = vmatpush.msra.mxu0 0.0
    %228 = vmatpush.msra.mxu0 0.0
    %229 = vmatpush.msra.mxu0 %v212
    %230 = vmatmul.f32.gmra.mxu0 %v209
    %v231 = vpop.f32.mrf.mxu0
    %v232 = vadd.f32 0.0, %v231
    %233 = vdwg.mxu0
    %v234 = vmul.f32 %v70, %v232
    %v236 = vsel %vm46, %v234, 0
    %238 = vmatpush.msra.mxu0 0.0
    %239 = vmatpush.msra.mxu0 0.0
    %240 = vmatpush.msra.mxu0 0.0
    %241 = vmatpush.msra.mxu0 %v85
    %242 = vmatpush.msra.mxu0 %v84
    %243 = vmatpush.msra.mxu0 %v83
    %244 = vmatpush.msra.mxu0 %v82
    %245 = vmatpush.msra.mxu0 %v81
    %246 = vmatpush.msra.mxu0 %v80
    %247 = vmatpush.msra.mxu0 %v79
    %248 = vmatpush.msra.mxu0 %v78
    %249 = vmatpush.msra.mxu0 %v77
    %250 = vmatpush.msra.mxu0 %v76
    %251 = vmatpush.msra.mxu0 %v75
    %252 = vmatpush.msra.mxu0 %v74
    %253 = vmatpush.msra.mxu0 %v73
    %254 = vmatmul.f32.gmra.mxu0 %v236
    %v255 = vpop.f32.mrf.mxu0
    %v256 = vadd.f32 0.0, %v255
    %257 = vdwg.mxu0
    %259 = vrot.lane.b32.xlu0 %v256, 16
    %v260 = vpop.permute.xlu0 %259
    %vm262 = vcmask 261248
    %263 = vst.msk [vmem:[#allocation5] sm:$0xff] %vm262, %v260
    %vm264 = vcmask 966544
    %v265 = vsel %vm264, %v68, -inf
    %266 = vmax.xlane.f32.xlu0 %v265
    %v267 = vpop.xlane.xlu0 %266
    %v268 = vsub.f32 %v68, %v267
    %v269 = vmul.f32 %v268, 1.442695
    %v270 = vpow.pop %v269
    %272 = vrot.lane.b32.xlu0 %v270, 14
    %v273 = vpop.permute.xlu0 %272
    %v275 = vsel %vm182, %v273, 0.0
    %276 = vadd.xlane.f32.xlu0 %v275
    %v277 = vpop.xlane.xlu0 %276
    %v278 = vrcp.pop %v277
    %v279 = vmul.f32 %v277, %v278
    %v280 = vsub.f32 1.0, %v279
    %v281 = vmul.f32 %v278, %v280
    %v282 = vadd.f32 %v278, %v281
    %vm283 = vweird.f32 %v277
    %vm284 = vweird.f32 %v278
    %vm285 = vmor %vm283, %vm284
    %v286 = vsel %vm285, %v278, %v282
    %v287 = vand.u32 2147483647, %v277
    %vm288 = vcmp.eq.f32.partialorder %v287, 8.507059e+37
    %v289 = vand.u32 %v277, 2147483648
    %v290 = vor.u32 1.1754944e-38, %v289
    %v291 = vsel %vm288, %v290, %v286
    %v292 = vmul.f32 %v270, %v291
    %294 = vrot.lane.b32.xlu0 %v292, 14
    %v295 = vpop.permute.xlu0 %294
    %v296 = vrot.slane %v72, 2
    %v297 = vsel %vm182, %v295, 0
    %v299 = vsel %vm211, %v296, 0
    %301 = vmatpush.msra.mxu0 0.0
    %302 = vmatpush.msra.mxu0 0.0
    %303 = vmatpush.msra.mxu0 0.0
    %304 = vmatpush.msra.mxu0 0.0
    %305 = vmatpush.msra.mxu0 0.0
    %306 = vmatpush.msra.mxu0 0.0
    %307 = vmatpush.msra.mxu0 0.0
    %308 = vmatpush.msra.mxu0 0.0
    %309 = vmatpush.msra.mxu0 0.0
    %310 = vmatpush.msra.mxu0 0.0
    %311 = vmatpush.msra.mxu0 0.0
    %312 = vmatpush.msra.mxu0 0.0
    %313 = vmatpush.msra.mxu0 0.0
    %314 = vmatpush.msra.mxu0 0.0
    %315 = vmatpush.msra.mxu0 0.0
    %316 = vmatpush.msra.mxu0 %v299
    %317 = vmatmul.f32.gmra.mxu0 %v297
    %v318 = vpop.f32.mrf.mxu0
    %v319 = vadd.f32 0.0, %v318
    %320 = vdwg.mxu0
    %v321 = vmul.f32 %v70, %v319
    %v323 = vsel %vm46, %v321, 0
    %325 = vmatpush.msra.mxu0 0.0
    %326 = vmatpush.msra.mxu0 0.0
    %327 = vmatpush.msra.mxu0 0.0
    %328 = vmatpush.msra.mxu0 %v85
    %329 = vmatpush.msra.mxu0 %v84
    %330 = vmatpush.msra.mxu0 %v83
    %331 = vmatpush.msra.mxu0 %v82
    %332 = vmatpush.msra.mxu0 %v81
    %333 = vmatpush.msra.mxu0 %v80
    %334 = vmatpush.msra.mxu0 %v79
    %335 = vmatpush.msra.mxu0 %v78
    %336 = vmatpush.msra.mxu0 %v77
    %337 = vmatpush.msra.mxu0 %v76
    %338 = vmatpush.msra.mxu0 %v75
    %339 = vmatpush.msra.mxu0 %v74
    %340 = vmatpush.msra.mxu0 %v73
    %341 = vmatmul.f32.gmra.mxu0 %v323
    %v342 = vpop.f32.mrf.mxu0
    %v343 = vadd.f32 0.0, %v342
    %344 = vdwg.mxu0
    %346 = vrot.lane.b32.xlu0 %v343, 32
    %v347 = vpop.permute.xlu0 %346
    %vm349 = vcmask 392448
    %350 = vst.msk [vmem:[#allocation5] sm:$0xff] %vm349, %v347
    // Predicated region
    $region22: #{tpu_custom_call.1} parent=1 // pred_check
      _
    $region23: #{tpu_custom_call.1} parent=1 // pred_check_branch
      %352 = sbr.rel (0) target = $region25
    $region24: #{tpu_custom_call.1} parent=1 // pred_region
      %354 = vsyncadd [#allocation4], 0
      %s356 = sshll.u32 [#allocation5], 4
      %s357 = int_to_ptr.vmem [resolvable:$true] %s356
      %s358 = sshll.u32 %s4, 4
      %s359 = int_to_ptr.hbm [resolvable:$true] %s358
      %361 = dma.vmem_to_hbm [thread:$0]  %s357, 128, %s359, [#allocation4]
    $region25: #{tpu_custom_call.1} parent=1 // pred_fallthru
      _
    // Predicated region
    $region26: #{tpu_custom_call.1} parent=1 // pred_check
      _
    $region27: #{tpu_custom_call.1} parent=1 // pred_check_branch
      %363 = sbr.rel (0) target = $region29
    $region28: #{tpu_custom_call.1} parent=1 // pred_region
      %365 = dma.done [#allocation4], 128
    $region29: #{tpu_custom_call.1} parent=1 // pred_fallthru
      _
    %366 = vsyncpa [#allocation3], 1
    %367 = vsyncpa [#allocation4], 1

</llo_original>
